<compile_context>
chip_gen: v7x
topology: tpu7x:2x2x1
jax: 0.10.0
libtpu: 0.0.40
codegen_flags: <defaults>
</compile_context>

<pallas_src>
import functools

import jax
import jax.numpy as jnp
from jax.experimental import pallas as pl
from jax.experimental.pallas import tpu as pltpu


def _round_up(n: int, m: int) -> int:
    return ((n + m - 1) // m) * m


def _cdiv(n: int, m: int) -> int:
    return (n + m - 1) // m


# ---------------------------------------------------------------------------
# Kernels
# ---------------------------------------------------------------------------

def _kernel_full_k(x_ref, w_ref, b_ref, o_ref):
    # x_ref: [TM, D], w_ref: [D, C_pad], b_ref: [1, C_pad], o_ref: [TM, C_pad]
    # Padded bias columns are -1e30 (weight pad is 0), so padded logits are
    # already ~-1e30: no in-kernel class masking required.
    logits = jnp.dot(x_ref[...], w_ref[...], preferred_element_type=jnp.float32)
    logits = logits + b_ref[...]
    m = jnp.max(logits, axis=-1, keepdims=True)
    shifted = logits - m
    lse = jnp.log(jnp.sum(jnp.exp(shifted), axis=-1, keepdims=True))
    o_ref[...] = (shifted - lse).astype(o_ref.dtype)


def _kernel_tiled_k(x_ref, w_ref, b_ref, o_ref, acc_ref):
    # Contraction (K) axis tiled on grid axis 1 ("arbitrary"), f32 accumulator.
    k = pl.program_id(1)

    @pl.when(k == 0)
    def _():
        acc_ref[...] = jnp.zeros_like(acc_ref)

    acc_ref[...] += jnp.dot(
        x_ref[...], w_ref[...], preferred_element_type=jnp.float32
    )

    @pl.when(k == pl.num_programs(1) - 1)
    def _():
        logits = acc_ref[...] + b_ref[...]
        m = jnp.max(logits, axis=-1, keepdims=True)
        shifted = logits - m
        lse = jnp.log(jnp.sum(jnp.exp(shifted), axis=-1, keepdims=True))
        o_ref[...] = (shifted - lse).astype(o_ref.dtype)


# ---------------------------------------------------------------------------
# Parameter preparation (done once, outside the per-call forward)
# ---------------------------------------------------------------------------

def prepare_mlp_params(weight_t, bias, *, use_bf16: bool = False):
    """Pad / cast nn.Linear params once.

    weight_t: [input_size, n_classes]  (transposed nn.Linear weight)
    bias:     [n_classes]

    Returns (w_pad [input_size, c_pad], b_pad [1, c_pad]) where the padded
    class columns have weight 0 and bias -1e30, so the kernel never needs to
    mask them.
    """
    input_size, n_classes = weight_t.shape
    c_pad = _round_up(n_classes, 128)
    mm_dtype = jnp.bfloat16 if use_bf16 else jnp.float32
    w = weight_t.astype(mm_dtype)
    b = bias.astype(jnp.float32)
    if c_pad != n_classes:
        w = jnp.pad(w, ((0, 0), (0, c_pad - n_classes)))
        b = jnp.pad(b, (0, c_pad - n_classes), constant_values=-1e30)
    return w, b.reshape(1, c_pad)


# ---------------------------------------------------------------------------
# Forward
# ---------------------------------------------------------------------------

_K_TILE = 512  # contraction tile when input_size is large


@functools.partial(
    jax.jit, static_argnames=("n_classes", "tm", "single_buffer_params")
)
def _mlp_forward_impl(x, w_pad, b_pad, *, n_classes, tm, single_buffer_params):
    input_size, c_pad = w_pad.shape

    # out.contiguous().view(-1, n_classes): flatten all leading dims.
    x2d = x.reshape(-1, input_size)
    if x2d.dtype != w_pad.dtype:
        x2d = x2d.astype(w_pad.dtype)  # single cast pass; none at all for f32
    batch = x2d.shape[0]

    # --- batch tiling (no HBM pre-padding of x; ragged last block is fine) --
    align = 16 if w_pad.dtype == jnp.bfloat16 else 8
    if batch > tm:
        tile_m = tm
    elif batch >= 4 * align:
        # Moderate batch: keep >= 2 grid steps so the "parallel" batch axis
        # can shard across both TensorCores on v7x.
        tile_m = _round_up(_cdiv(batch, 2), align)
    else:
        tile_m = batch  # one block equal to the full batch dim (always legal)
    grid_m = _cdiv(batch, tile_m)

    # Grid-invariant weight/bias: request single buffering (no dead 2nd copy).
    resident = (
        dict(pipeline_mode=pl.Buffered(1)) if single_buffer_params else {}
    )

    use_k_grid = input_size > 2048 and input_size % _K_TILE == 0
    tile_k = _K_TILE if use_k_grid else input_size

    # --- VMEM budget -> explicit limit (safe on v5e / v6e / v7x) ------------
    itemsize = jnp.dtype(w_pad.dtype).itemsize
    w_bufs = 2 if use_k_grid else (1 if single_buffer_params else 2)
    vmem_bytes = (
        w_bufs * tile_k * c_pad * itemsize          # weight buffers
        + 2 * c_pad * 4                             # bias
        + 2 * tile_m * tile_k * itemsize            # x tiles (double-buffered)
        + 2 * tile_m * c_pad * 4                    # out tiles
        + (tile_m * c_pad * 4 if use_k_grid else 0)  # accumulator
    )
    vmem_limit = int(min(100 * 1024 * 1024, max(16 * 1024 * 1024, 2 * vmem_bytes)))

    out_shape = jax.ShapeDtypeStruct((batch, c_pad), jnp.float32)

    if not use_k_grid:
        out = pl.pallas_call(
            _kernel_full_k,
            out_shape=out_shape,
            grid_spec=pltpu.PrefetchScalarGridSpec(
                num_scalar_prefetch=0,
                grid=(grid_m,),
                in_specs=[
                    pl.BlockSpec((tile_m, input_size), lambda i: (i, 0)),
                    pl.BlockSpec((input_size, c_pad), lambda i: (0, 0), **resident),
                    pl.BlockSpec((1, c_pad), lambda i: (0, 0), **resident),
                ],
                out_specs=pl.BlockSpec((tile_m, c_pad), lambda i: (i, 0)),
            ),
            compiler_params=pltpu.CompilerParams(
                dimension_semantics=("parallel",),
                vmem_limit_bytes=vmem_limit,
            ),
        )(x2d, w_pad, b_pad)
    else:
        num_k = input_size // tile_k
        out = pl.pallas_call(
            _kernel_tiled_k,
            out_shape=out_shape,
            grid_spec=pltpu.PrefetchScalarGridSpec(
                num_scalar_prefetch=0,
                grid=(grid_m, num_k),
                in_specs=[
                    pl.BlockSpec((tile_m, tile_k), lambda i, k: (i, k)),
                    pl.BlockSpec((tile_k, c_pad), lambda i, k: (k, 0)),
                    pl.BlockSpec((1, c_pad), lambda i, k: (0, 0), **resident),
                ],
                out_specs=pl.BlockSpec((tile_m, c_pad), lambda i, k: (i, 0)),
                scratch_shapes=[pltpu.VMEM((tile_m, c_pad), jnp.float32)],
            ),
            compiler_params=pltpu.CompilerParams(
                dimension_semantics=("parallel", "arbitrary"),
                vmem_limit_bytes=vmem_limit,
            ),
        )(x2d, w_pad, b_pad)

    if c_pad != n_classes:
        # NOTE: for n_classes << 128 this slice is an extra HBM pass; callers
        # that can consume the padded [batch, c_pad] output should skip it.
        out = out[:, :n_classes]
    return out


def mlp_forward(x, w_pad, b_pad, *, n_classes: int, tm: int = 512):
    """log_softmax(x2d @ W + b, axis=-1) with x2d = x.reshape(-1, input_size).

    x:      [..., input_size]
    w_pad:  [input_size, c_pad]  from prepare_mlp_params
    b_pad:  [1, c_pad]           from prepare_mlp_params
    Returns [prod(leading dims), n_classes] (dropout p=0 is the identity).
    """
    try:
        return _mlp_forward_impl(
            x, w_pad, b_pad, n_classes=n_classes, tm=tm, single_buffer_params=True
        )
    except Exception:
        # Fallback if this JAX build rejects pl.Buffered(1) on pallas_call
        # BlockSpecs: identical kernel with default double-buffering.
        return _mlp_forward_impl(
            x, w_pad, b_pad, n_classes=n_classes, tm=tm, single_buffer_params=False
        )


if __name__ == "__main__":
    # Small shapes consistent with the module: MLP(input_size=32, n_classes=16)
    batch = 8
    input_size = 32
    n_classes = 16

    key = jax.random.PRNGKey(0)
    kx, kw, kb = jax.random.split(key, 3)

    # nn.Linear-style init: U(-1/sqrt(in), 1/sqrt(in)); stored transposed [in, out].
    bound = 1.0 / (input_size ** 0.5)
    weight_t = jax.random.uniform(
        kw, (input_size, n_classes), jnp.float32, minval=-bound, maxval=bound
    )
    bias = jax.random.uniform(
        kb, (n_classes,), jnp.float32, minval=-bound, maxval=bound
    )
    x = jax.random.normal(kx, (batch, input_size), jnp.float32)

    # Reference in plain JAX.
    ref = jax.nn.log_softmax(x @ weight_t + bias, axis=-1)

    # f32 path (exact module semantics): tight tolerance.
    w_pad, b_pad = prepare_mlp_params(weight_t, bias, use_bf16=False)
    out = jax.block_until_ready(mlp_forward(x, w_pad, b_pad, n_classes=n_classes))
    assert out.shape == (batch, n_classes)
    assert jnp.allclose(out, ref, atol=1e-5, rtol=1e-5)

    # bf16 matmul-input path (f32 accumulation / softmax): looser tolerance.
    w16, b16 = prepare_mlp_params(weight_t, bias, use_bf16=True)
    out16 = jax.block_until_ready(mlp_forward(x, w16, b16, n_classes=n_classes))
    assert out16.shape == (batch, n_classes)
    assert jnp.allclose(out16, ref, atol=5e-2, rtol=5e-2)

    print("KERNEL_OK")
</pallas_src>

<mosaic_0001>
module attributes {stable_mosaic.version = 11 : i64} {
  func.func @_kernel_full_k(%arg0: i32, %arg1: memref<8x32xf32, #tpu.memory_space<vmem>>, %arg2: memref<32x128xf32, #tpu.memory_space<vmem>>, %arg3: memref<1x128xf32, #tpu.memory_space<vmem>>, %arg4: memref<8x128xf32, #tpu.memory_space<vmem>>) attributes {dimension_semantics = [#tpu.dimension_semantics<parallel>], iteration_bounds = array<i64: 1>, scalar_prefetch = 0 : i64, scratch_operands = 0 : i64, tpu.core_type = #tpu.core_type<tc>, window_params = [{transform_indices = @transform_0, window_bounds = array<i64: 8, 32>}, {pipeline_mode = #tpu.pipeline_mode<synchronous>, transform_indices = @transform_1, window_bounds = array<i64: 32, 128>}, {pipeline_mode = #tpu.pipeline_mode<synchronous>, transform_indices = @transform_2, window_bounds = array<i64: 1, 128>}, {transform_indices = @transform_3, window_bounds = array<i64: 8, 128>}]} {
    %c0 = arith.constant 0 : index
    %c0_0 = arith.constant 0 : index
    %0 = vector.load %arg1[%c0, %c0_0] : memref<8x32xf32, #tpu.memory_space<vmem>>, vector<8x32xf32>
    %c0_1 = arith.constant 0 : index
    %c0_2 = arith.constant 0 : index
    %1 = vector.load %arg2[%c0_1, %c0_2] : memref<32x128xf32, #tpu.memory_space<vmem>>, vector<32x128xf32>
    %cst = arith.constant dense<0.000000e+00> : vector<8x128xf32>
    %2 = tpu.matmul %0, %1, %cst {dimension_numbers = #tpu.dot_dimension_numbers<[1], [0], [0], [1], [0, 0, 1, 1], [], []>} : vector<8x32xf32>, vector<32x128xf32>, vector<8x128xf32> -> vector<8x128xf32>
    %c0_3 = arith.constant 0 : index
    %c0_4 = arith.constant 0 : index
    %3 = vector.load %arg3[%c0_3, %c0_4] : memref<1x128xf32, #tpu.memory_space<vmem>>, vector<1x128xf32>
    %4 = vector.broadcast %3 : vector<1x128xf32> to vector<8x128xf32>
    %5 = arith.addf %2, %4 : vector<8x128xf32>
    %cst_5 = arith.constant dense<0xFF800000> : vector<8xf32>
    %6 = vector.multi_reduction <maximumf>, %5, %cst_5 [1] : vector<8x128xf32> to vector<8xf32>
    %7 = vector.shape_cast %6 : vector<8xf32> to vector<8x1xf32>
    %8 = vector.broadcast %7 : vector<8x1xf32> to vector<8x128xf32>
    %9 = arith.subf %5, %8 : vector<8x128xf32>
    %10 = math.exp %9 : vector<8x128xf32>
    %cst_6 = arith.constant dense<0.000000e+00> : vector<8xf32>
    %11 = vector.multi_reduction <add>, %10, %cst_6 [1] : vector<8x128xf32> to vector<8xf32>
    %12 = vector.shape_cast %11 : vector<8xf32> to vector<8x1xf32>
    %13 = math.log %12 : vector<8x1xf32>
    %14 = vector.broadcast %13 : vector<8x1xf32> to vector<8x128xf32>
    %15 = arith.subf %9, %14 : vector<8x128xf32>
    %c0_7 = arith.constant 0 : index
    %c0_8 = arith.constant 0 : index
    %16 = vector.load %arg4[%c0_7, %c0_8] : memref<8x128xf32, #tpu.memory_space<vmem>>, vector<8x128xf32>
    tpu.vector_store %arg4[%c0_7, %c0_8], %15 {strides = array<i32>} : memref<8x128xf32, #tpu.memory_space<vmem>>, vector<8x128xf32>,
    return
  }
  func.func @transform_0(%arg0: i32) -> (i32, i32) {
    %c0_i32 = arith.constant 0 : i32
    %c0_i32_0 = arith.constant 0 : i32
    return %arg0, %c0_i32 : i32, i32
  }
  func.func @transform_1(%arg0: i32) -> (i32, i32) {
    %c0_i32 = arith.constant 0 : i32
    %c0_i32_0 = arith.constant 0 : i32
    %c0_i32_1 = arith.constant 0 : i32
    return %c0_i32, %c0_i32_0 : i32, i32
  }
  func.func @transform_2(%arg0: i32) -> (i32, i32) {
    %c0_i32 = arith.constant 0 : i32
    %c0_i32_0 = arith.constant 0 : i32
    %c0_i32_1 = arith.constant 0 : i32
    return %c0_i32, %c0_i32_0 : i32, i32
  }
  func.func @transform_3(%arg0: i32) -> (i32, i32) {
    %c0_i32 = arith.constant 0 : i32
    %c0_i32_0 = arith.constant 0 : i32
    return %arg0, %c0_i32 : i32, i32
  }
}

module attributes {stable_mosaic.version = 11 : i64} {
  func.func @_kernel_full_k(%arg0: i32, %arg1: memref<8x32xf32, #tpu.memory_space<vmem>>, %arg2: memref<32x128xf32, #tpu.memory_space<vmem>>, %arg3: memref<1x128xf32, #tpu.memory_space<vmem>>, %arg4: memref<8x128xf32, #tpu.memory_space<vmem>>) attributes {dimension_semantics = [#tpu.dimension_semantics<parallel>], iteration_bounds = array<i64: 1>, scalar_prefetch = 0 : i64, scratch_operands = 0 : i64, tpu.core_type = #tpu.core_type<tc>, window_params = [{transform_indices = @transform_0, window_bounds = array<i64: 8, 32>}, {pipeline_mode = #tpu.pipeline_mode<synchronous>, transform_indices = @transform_1, window_bounds = array<i64: 32, 128>}, {pipeline_mode = #tpu.pipeline_mode<synchronous>, transform_indices = @transform_2, window_bounds = array<i64: 1, 128>}, {transform_indices = @transform_3, window_bounds = array<i64: 8, 128>}]} {
    %c0 = arith.constant 0 : index
    %c0_0 = arith.constant 0 : index
    %0 = vector.load %arg1[%c0, %c0_0] : memref<8x32xf32, #tpu.memory_space<vmem>>, vector<8x32xf32>
    %c0_1 = arith.constant 0 : index
    %c0_2 = arith.constant 0 : index
    %1 = vector.load %arg2[%c0_1, %c0_2] : memref<32x128xf32, #tpu.memory_space<vmem>>, vector<32x128xf32>
    %cst = arith.constant dense<0.000000e+00> : vector<8x128xf32>
    %2 = tpu.matmul %0, %1, %cst {dimension_numbers = #tpu.dot_dimension_numbers<[1], [0], [0], [1], [0, 0, 1, 1], [], []>} : vector<8x32xf32>, vector<32x128xf32>, vector<8x128xf32> -> vector<8x128xf32>
    %c0_3 = arith.constant 0 : index
    %c0_4 = arith.constant 0 : index
    %3 = vector.load %arg3[%c0_3, %c0_4] : memref<1x128xf32, #tpu.memory_space<vmem>>, vector<1x128xf32>
    %4 = vector.broadcast %3 : vector<1x128xf32> to vector<8x128xf32>
    %5 = arith.addf %2, %4 : vector<8x128xf32>
    %cst_5 = arith.constant dense<0xFF800000> : vector<8xf32>
    %6 = vector.multi_reduction <maximumf>, %5, %cst_5 [1] : vector<8x128xf32> to vector<8xf32>
    %7 = vector.shape_cast %6 : vector<8xf32> to vector<8x1xf32>
    %8 = vector.broadcast %7 : vector<8x1xf32> to vector<8x128xf32>
    %9 = arith.subf %5, %8 : vector<8x128xf32>
    %10 = math.exp %9 : vector<8x128xf32>
    %cst_6 = arith.constant dense<0.000000e+00> : vector<8xf32>
    %11 = vector.multi_reduction <add>, %10, %cst_6 [1] : vector<8x128xf32> to vector<8xf32>
    %12 = vector.shape_cast %11 : vector<8xf32> to vector<8x1xf32>
    %13 = math.log %12 : vector<8x1xf32>
    %14 = vector.broadcast %13 : vector<8x1xf32> to vector<8x128xf32>
    %15 = arith.subf %9, %14 : vector<8x128xf32>
    %c0_7 = arith.constant 0 : index
    %c0_8 = arith.constant 0 : index
    %16 = vector.load %arg4[%c0_7, %c0_8] : memref<8x128xf32, #tpu.memory_space<vmem>>, vector<8x128xf32>
    tpu.vector_store %arg4[%c0_7, %c0_8], %15 {strides = array<i32>} : memref<8x128xf32, #tpu.memory_space<vmem>>, vector<8x128xf32>,
    return
  }
  func.func @transform_0(%arg0: i32) -> (i32, i32) {
    %c0_i32 = arith.constant 0 : i32
    %c0_i32_0 = arith.constant 0 : i32
    return %arg0, %c0_i32 : i32, i32
  }
  func.func @transform_1(%arg0: i32) -> (i32, i32) {
    %c0_i32 = arith.constant 0 : i32
    %c0_i32_0 = arith.constant 0 : i32
    %c0_i32_1 = arith.constant 0 : i32
    return %c0_i32, %c0_i32_0 : i32, i32
  }
  func.func @transform_2(%arg0: i32) -> (i32, i32) {
    %c0_i32 = arith.constant 0 : i32
    %c0_i32_0 = arith.constant 0 : i32
    %c0_i32_1 = arith.constant 0 : i32
    return %c0_i32, %c0_i32_0 : i32, i32
  }
  func.func @transform_3(%arg0: i32) -> (i32, i32) {
    %c0_i32 = arith.constant 0 : i32
    %c0_i32_0 = arith.constant 0 : i32
    return %arg0, %c0_i32 : i32, i32
  }
}

</mosaic_0001>

<llo_original>
// kernel: _mlp_forward_impl.1
$region0: #{_mlp_forward_impl.1}
  #allocation0 [shape = 'u32[]', space=smem, size = 0x4, offset = 0x4, fixed_abs, tag = 'smem constant byte address 0x4 - core index']
  #allocation1 [shape = 'u32[144,128]{1,0:T(1,128)}', space=vmem, size = 0x12000, scoped, tag = 'internal scratch']
  %s0 = inlined_call_operand.hbm [shape: f32[8,32], index: 0, kind: input, shape index: {}]
  %s1 = inlined_call_operand.hbm [shape: f32[32,128], index: 1, kind: input, shape index: {}]
  %s2 = inlined_call_operand.vmem [shape: f32[1,128], index: 2, kind: input, shape index: {}]
  %s3 = inlined_call_operand.hbm [shape: f32[8,128], index: 3, kind: output, shape index: {}]
  %s4 = sld [smem:[#allocation0]]
  $region30: #{_mlp_forward_impl.1} parent=0
    _
  %s6 = ssub.s32 1, %s4
  %s7 = scalar_select 0, %s6, %s4
  $region1: #{_mlp_forward_impl.1} parent=0
    #allocation2 [shape = 'u8[4096]{0}', space=vmem, size = 0x1000, scoped, tag = 'input window, operand 0, single buffered']
    #allocation3 [shape = 's32[1]{0}', space=sflag, size = 0x4, scoped, tag = 'scoped memory for _mlp_forward_impl.1']
    #allocation4 [shape = 's32[1]{0}', space=sflag, size = 0x4, scoped, tag = 'scoped memory for _mlp_forward_impl.1']
    #allocation5 [shape = 'u8[16384]{0}', space=vmem, size = 0x4000, scoped, tag = 'input window, operand 1, single buffered']
    #allocation6 [shape = 's32[1]{0}', space=sflag, size = 0x4, scoped, tag = 'scoped memory for _mlp_forward_impl.1']
    #allocation7 [shape = 'u8[4096]{0}', space=vmem, size = 0x1000, scoped, tag = 'output window, operand 0, single buffered']
    %8 = vsyncpa [#allocation3], 0
    %9 = vsyncpa [#allocation6], 0
    %10 = vsyncpa [#allocation4], 0
    // Predicated region
    $region2: #{_mlp_forward_impl.1} parent=1 // pred_check
      _
    $region3: #{_mlp_forward_impl.1} parent=1 // pred_check_branch
      %12 = sbr.rel (0) target = $region5
    $region4: #{_mlp_forward_impl.1} parent=1 // pred_region
      %s14 = ssub.s32 128, 128
      %15 = vsyncadd [#allocation3], %s14
      %s17 = sshll.u32 [#allocation2], 4
      %s18 = int_to_ptr.vmem [resolvable:$true] %s17
      %20 = dma.hbm_to_vmem [thread:$0]  %s0, 128, %s18, [#allocation3]
    $region5: #{_mlp_forward_impl.1} parent=1 // pred_fallthru
      _
    // Predicated region
    $region6: #{_mlp_forward_impl.1} parent=1 // pred_check
      _
    $region7: #{_mlp_forward_impl.1} parent=1 // pred_check_branch
      %22 = sbr.rel (0) target = $region9
    $region8: #{_mlp_forward_impl.1} parent=1 // pred_region
      %s24 = ssub.s32 512, 512
      %25 = vsyncadd [#allocation6], %s24
      %s26 = sshll.u32 [#allocation5], 4
      %s27 = int_to_ptr.vmem [resolvable:$true] %s26
      %32 = dma.hbm_to_vmem [thread:$0]  %s1, 512, %s27, [#allocation6], 128, 128, 8
    $region9: #{_mlp_forward_impl.1} parent=1 // pred_fallthru
      _
    // Predicated region
    $region10: #{_mlp_forward_impl.1} parent=1 // pred_check
      _
    $region11: #{_mlp_forward_impl.1} parent=1 // pred_check_branch
      %34 = sbr.rel (0) target = $region13
    $region12: #{_mlp_forward_impl.1} parent=1 // pred_region
      _
    $region13: #{_mlp_forward_impl.1} parent=1 // pred_fallthru
      _
    // Predicated region
    $region14: #{_mlp_forward_impl.1} parent=1 // pred_check
      _
    $region15: #{_mlp_forward_impl.1} parent=1 // pred_check_branch
      %36 = sbr.rel (0) target = $region17
    $region16: #{_mlp_forward_impl.1} parent=1 // pred_region
      %37 = dma.done [#allocation3], 128
    $region17: #{_mlp_forward_impl.1} parent=1 // pred_fallthru
      _
    // Predicated region
    $region18: #{_mlp_forward_impl.1} parent=1 // pred_check
      _
    $region19: #{_mlp_forward_impl.1} parent=1 // pred_check_branch
      %39 = sbr.rel (0) target = $region21
    $region20: #{_mlp_forward_impl.1} parent=1 // pred_region
      %40 = dma.done [#allocation6], 512
    $region21: #{_mlp_forward_impl.1} parent=1 // pred_fallthru
      _
    %v41 = vld [vmem:[#allocation2] sm:$0xff]
    %v42 = vld [vmem:[#allocation5] sm:$0xff]
    %v43 = vld [vmem:[#allocation5 + $0x8] sm:$0xff]
    %v44 = vld [vmem:[#allocation5 + $0x10] sm:$0xff]
    %v45 = vld [vmem:[#allocation5 + $0x18] sm:$0xff]
    %v46 = vld [vmem:[%s2] sm:$0x1]
    %v48 = vlaneseq
    %v49 = vshrl.u32 %v48, 7
    %v50 = vsub.s32 0, %v49
    %v51 = vrot.slane %v46, %v50
    %vm53 = vcmask 261120
    %v55 = vsel %vm53, %v41, 0
    %57 = vmatprep.subr.mxu0 0.0
    %58 = vmatpush1.msra.mxu0 %v42
    %59 = vmatprep.subr.mxu0 0.0
    %60 = vmatpush1.msra.mxu0 %v43
    %61 = vmatprep.subr.mxu0 0.0
    %62 = vmatpush1.msra.mxu0 %v44
    %63 = vmatprep.subr.mxu0 0.0
    %64 = vmatpush1.msra.mxu0 %v45
    %65 = vmatprep.subr.mxu0 0.0
    %66 = vmatpush1.msra.mxu0 0.0
    %67 = vmatprep.subr.mxu0 0.0
    %68 = vmatpush1.msra.mxu0 0.0
    %69 = vmatprep.subr.mxu0 0.0
    %70 = vmatpush1.msra.mxu0 0.0
    %71 = vmatprep.subr.mxu0 0.0
    %72 = vmatpush1.msra.mxu0 0.0
    %73 = vmatprep.subr.mxu0 0.0
    %74 = vmatpush1.msra.mxu0 0.0
    %75 = vmatprep.subr.mxu0 0.0
    %76 = vmatpush1.msra.mxu0 0.0
    %77 = vmatprep.subr.mxu0 0.0
    %78 = vmatpush1.msra.mxu0 0.0
    %79 = vmatprep.subr.mxu0 0.0
    %80 = vmatpush1.msra.mxu0 0.0
    %81 = vmatprep.subr.mxu0 0.0
    %82 = vmatpush1.msra.mxu0 0.0
    %83 = vmatprep.subr.mxu0 0.0
    %84 = vmatpush1.msra.mxu0 0.0
    %85 = vmatprep.subr.mxu0 0.0
    %86 = vmatpush1.msra.mxu0 0.0
    %87 = vmatprep.subr.mxu0 0.0
    %88 = vmatpush1.msra.mxu0 0.0
    %89 = vmatprep.subr.mxu0 0.0
    %90 = vmatpush1.msra.mxu0 0.0
    %91 = vmatprep.subr.mxu0 0.0
    %92 = vmatpush1.msra.mxu0 0.0
    %93 = vmatprep.subr.mxu0 0.0
    %94 = vmatpush1.msra.mxu0 0.0
    %95 = vmatprep.subr.mxu0 0.0
    %96 = vmatpush1.msra.mxu0 0.0
    %97 = vmatprep.subr.mxu0 0.0
    %98 = vmatpush1.msra.mxu0 0.0
    %99 = vmatprep.subr.mxu0 0.0
    %100 = vmatpush1.msra.mxu0 0.0
    %101 = vmatprep.subr.mxu0 0.0
    %102 = vmatpush1.msra.mxu0 0.0
    %103 = vmatprep.subr.mxu0 0.0
    %104 = vmatpush1.msra.mxu0 0.0
    %105 = vmatprep.subr.mxu0 0.0
    %106 = vmatpush1.msra.mxu0 0.0
    %107 = vmatprep.subr.mxu0 0.0
    %108 = vmatpush1.msra.mxu0 0.0
    %109 = vmatprep.subr.mxu0 0.0
    %110 = vmatpush1.msra.mxu0 0.0
    %111 = vmatprep.subr.mxu0 0.0
    %112 = vmatpush1.msra.mxu0 0.0
    %113 = vmatprep.subr.mxu0 0.0
    %114 = vmatpush1.msra.mxu0 0.0
    %115 = vmatprep.subr.mxu0 0.0
    %116 = vmatpush1.msra.mxu0 0.0
    %117 = vmatprep.subr.mxu0 0.0
    %118 = vmatpush1.msra.mxu0 0.0
    %119 = vmatprep.subr.mxu0 0.0
    %120 = vmatpush1.msra.mxu0 0.0
    %121 = vmatprep.mubr.f32.mxu0 0.0
    %122 = vmatmul.mubr.f32.gmra.mrb[0].mxu0 %v55
    %v123 = vpop.f32.mrb[0].mxu0
    %v124 = vadd.f32 %v51, %v123
    %v125 = vpop.f32.mrb[0].mxu0
    %126 = vdwg.mxu0
    %127 = vmax.xlane.f32.xlu0 %v124
    %v128 = vpop.xlane.xlu0 %127
    %v129 = vsub.f32 %v124, %v128
    %v130 = vmul.f32 %v129, 1.442695
    %v131 = vpow.pop %v130
    %132 = vadd.xlane.f32.xlu0 %v131
    %v133 = vpop.xlane.xlu0 %132
    %v134 = vlog2.pop %v133
    %v135 = vmul.f32 %v134, 0.6931472
    %v136 = vsub.f32 %v129, %v135
    %137 = vst [vmem:[#allocation7] sm:$0xff] %v136
    // Predicated region
    $region22: #{_mlp_forward_impl.1} parent=1 // pred_check
      _
    $region23: #{_mlp_forward_impl.1} parent=1 // pred_check_branch
      %139 = sbr.rel (0) target = $region25
    $region24: #{_mlp_forward_impl.1} parent=1 // pred_region
      %s141 = ssub.s32 128, 128
      %142 = vsyncadd [#allocation4], %s141
      %s144 = sshll.u32 [#allocation7], 4
      %s145 = int_to_ptr.vmem [resolvable:$true] %s144
      %147 = dma.vmem_to_hbm [thread:$0]  %s145, 128, %s3, [#allocation4]
    $region25: #{_mlp_forward_impl.1} parent=1 // pred_fallthru
      _
    // Predicated region
    $region26: #{_mlp_forward_impl.1} parent=1 // pred_check
      _
    $region27: #{_mlp_forward_impl.1} parent=1 // pred_check_branch
      %149 = sbr.rel (0) target = $region29
    $region28: #{_mlp_forward_impl.1} parent=1 // pred_region
      %150 = dma.done [#allocation4], 128
    $region29: #{_mlp_forward_impl.1} parent=1 // pred_fallthru
      _
    %151 = vsyncpa [#allocation3], 1
    %152 = vsyncpa [#allocation6], 1
    %153 = vsyncpa [#allocation4], 1

// kernel: _mlp_forward_impl.1
$region0: #{_mlp_forward_impl.1}
  #allocation0 [shape = 'u32[]', space=smem, size = 0x4, offset = 0x4, fixed_abs, tag = 'smem constant byte address 0x4 - core index']
  #allocation1 [shape = 'u32[144,128]{1,0:T(1,128)}', space=vmem, size = 0x12000, scoped, tag = 'internal scratch']
  %s0 = inlined_call_operand.hbm [shape: f32[8,32], index: 0, kind: input, shape index: {}]
  %s1 = inlined_call_operand.hbm [shape: f32[32,128], index: 1, kind: input, shape index: {}]
  %s2 = inlined_call_operand.vmem [shape: f32[1,128], index: 2, kind: input, shape index: {}]
  %s3 = inlined_call_operand.hbm [shape: f32[8,128], index: 3, kind: output, shape index: {}]
  %s4 = sld [smem:[#allocation0]]
  $region30: #{_mlp_forward_impl.1} parent=0
    _
  %s6 = ssub.s32 1, %s4
  %s7 = scalar_select 0, %s6, %s4
  $region1: #{_mlp_forward_impl.1} parent=0
    #allocation2 [shape = 'u8[4096]{0}', space=vmem, size = 0x1000, scoped, tag = 'input window, operand 0, single buffered']
    #allocation3 [shape = 's32[1]{0}', space=sflag, size = 0x4, scoped, tag = 'scoped memory for _mlp_forward_impl.1']
    #allocation4 [shape = 's32[1]{0}', space=sflag, size = 0x4, scoped, tag = 'scoped memory for _mlp_forward_impl.1']
    #allocation5 [shape = 'u8[16384]{0}', space=vmem, size = 0x4000, scoped, tag = 'input window, operand 1, single buffered']
    #allocation6 [shape = 's32[1]{0}', space=sflag, size = 0x4, scoped, tag = 'scoped memory for _mlp_forward_impl.1']
    #allocation7 [shape = 'u8[4096]{0}', space=vmem, size = 0x1000, scoped, tag = 'output window, operand 0, single buffered']
    %8 = vsyncpa [#allocation3], 0
    %9 = vsyncpa [#allocation6], 0
    %10 = vsyncpa [#allocation4], 0
    // Predicated region
    $region2: #{_mlp_forward_impl.1} parent=1 // pred_check
      _
    $region3: #{_mlp_forward_impl.1} parent=1 // pred_check_branch
      %12 = sbr.rel (0) target = $region5
    $region4: #{_mlp_forward_impl.1} parent=1 // pred_region
      %s14 = ssub.s32 128, 128
      %15 = vsyncadd [#allocation3], %s14
      %s17 = sshll.u32 [#allocation2], 4
      %s18 = int_to_ptr.vmem [resolvable:$true] %s17
      %20 = dma.hbm_to_vmem [thread:$0]  %s0, 128, %s18, [#allocation3]
    $region5: #{_mlp_forward_impl.1} parent=1 // pred_fallthru
      _
    // Predicated region
    $region6: #{_mlp_forward_impl.1} parent=1 // pred_check
      _
    $region7: #{_mlp_forward_impl.1} parent=1 // pred_check_branch
      %22 = sbr.rel (0) target = $region9
    $region8: #{_mlp_forward_impl.1} parent=1 // pred_region
      %s24 = ssub.s32 512, 512
      %25 = vsyncadd [#allocation6], %s24
      %s26 = sshll.u32 [#allocation5], 4
      %s27 = int_to_ptr.vmem [resolvable:$true] %s26
      %32 = dma.hbm_to_vmem [thread:$0]  %s1, 512, %s27, [#allocation6], 128, 128, 8
    $region9: #{_mlp_forward_impl.1} parent=1 // pred_fallthru
      _
    // Predicated region
    $region10: #{_mlp_forward_impl.1} parent=1 // pred_check
      _
    $region11: #{_mlp_forward_impl.1} parent=1 // pred_check_branch
      %34 = sbr.rel (0) target = $region13
    $region12: #{_mlp_forward_impl.1} parent=1 // pred_region
      _
    $region13: #{_mlp_forward_impl.1} parent=1 // pred_fallthru
      _
    // Predicated region
    $region14: #{_mlp_forward_impl.1} parent=1 // pred_check
      _
    $region15: #{_mlp_forward_impl.1} parent=1 // pred_check_branch
      %36 = sbr.rel (0) target = $region17
    $region16: #{_mlp_forward_impl.1} parent=1 // pred_region
      %37 = dma.done [#allocation3], 128
    $region17: #{_mlp_forward_impl.1} parent=1 // pred_fallthru
      _
    // Predicated region
    $region18: #{_mlp_forward_impl.1} parent=1 // pred_check
      _
    $region19: #{_mlp_forward_impl.1} parent=1 // pred_check_branch
      %39 = sbr.rel (0) target = $region21
    $region20: #{_mlp_forward_impl.1} parent=1 // pred_region
      %40 = dma.done [#allocation6], 512
    $region21: #{_mlp_forward_impl.1} parent=1 // pred_fallthru
      _
    %v41 = vld [vmem:[#allocation2] sm:$0xff]
    %v42 = vld [vmem:[#allocation5] sm:$0xff]
    %v43 = vld [vmem:[#allocation5 + $0x8] sm:$0xff]
    %v44 = vld [vmem:[#allocation5 + $0x10] sm:$0xff]
    %v45 = vld [vmem:[#allocation5 + $0x18] sm:$0xff]
    %v46 = vld [vmem:[%s2] sm:$0x1]
    %v48 = vlaneseq
    %v49 = vshrl.u32 %v48, 7
    %v50 = vsub.s32 0, %v49
    %v51 = vrot.slane %v46, %v50
    %vm53 = vcmask 261120
    %v55 = vsel %vm53, %v41, 0
    %57 = vmatprep.subr.mxu0 0.0
    %58 = vmatpush1.msra.mxu0 %v42
    %59 = vmatprep.subr.mxu0 0.0
    %60 = vmatpush1.msra.mxu0 %v43
    %61 = vmatprep.subr.mxu0 0.0
    %62 = vmatpush1.msra.mxu0 %v44
    %63 = vmatprep.subr.mxu0 0.0
    %64 = vmatpush1.msra.mxu0 %v45
    %65 = vmatprep.subr.mxu0 0.0
    %66 = vmatpush1.msra.mxu0 0.0
    %67 = vmatprep.subr.mxu0 0.0
    %68 = vmatpush1.msra.mxu0 0.0
    %69 = vmatprep.subr.mxu0 0.0
    %70 = vmatpush1.msra.mxu0 0.0
    %71 = vmatprep.subr.mxu0 0.0
    %72 = vmatpush1.msra.mxu0 0.0
    %73 = vmatprep.subr.mxu0 0.0
    %74 = vmatpush1.msra.mxu0 0.0
    %75 = vmatprep.subr.mxu0 0.0
    %76 = vmatpush1.msra.mxu0 0.0
    %77 = vmatprep.subr.mxu0 0.0
    %78 = vmatpush1.msra.mxu0 0.0
    %79 = vmatprep.subr.mxu0 0.0
    %80 = vmatpush1.msra.mxu0 0.0
    %81 = vmatprep.subr.mxu0 0.0
    %82 = vmatpush1.msra.mxu0 0.0
    %83 = vmatprep.subr.mxu0 0.0
    %84 = vmatpush1.msra.mxu0 0.0
    %85 = vmatprep.subr.mxu0 0.0
    %86 = vmatpush1.msra.mxu0 0.0
    %87 = vmatprep.subr.mxu0 0.0
    %88 = vmatpush1.msra.mxu0 0.0
    %89 = vmatprep.subr.mxu0 0.0
    %90 = vmatpush1.msra.mxu0 0.0
    %91 = vmatprep.subr.mxu0 0.0
    %92 = vmatpush1.msra.mxu0 0.0
    %93 = vmatprep.subr.mxu0 0.0
    %94 = vmatpush1.msra.mxu0 0.0
    %95 = vmatprep.subr.mxu0 0.0
    %96 = vmatpush1.msra.mxu0 0.0
    %97 = vmatprep.subr.mxu0 0.0
    %98 = vmatpush1.msra.mxu0 0.0
    %99 = vmatprep.subr.mxu0 0.0
    %100 = vmatpush1.msra.mxu0 0.0
    %101 = vmatprep.subr.mxu0 0.0
    %102 = vmatpush1.msra.mxu0 0.0
    %103 = vmatprep.subr.mxu0 0.0
    %104 = vmatpush1.msra.mxu0 0.0
    %105 = vmatprep.subr.mxu0 0.0
    %106 = vmatpush1.msra.mxu0 0.0
    %107 = vmatprep.subr.mxu0 0.0
    %108 = vmatpush1.msra.mxu0 0.0
    %109 = vmatprep.subr.mxu0 0.0
    %110 = vmatpush1.msra.mxu0 0.0
    %111 = vmatprep.subr.mxu0 0.0
    %112 = vmatpush1.msra.mxu0 0.0
    %113 = vmatprep.subr.mxu0 0.0
    %114 = vmatpush1.msra.mxu0 0.0
    %115 = vmatprep.subr.mxu0 0.0
    %116 = vmatpush1.msra.mxu0 0.0
    %117 = vmatprep.subr.mxu0 0.0
    %118 = vmatpush1.msra.mxu0 0.0
    %119 = vmatprep.subr.mxu0 0.0
    %120 = vmatpush1.msra.mxu0 0.0
    %121 = vmatprep.mubr.f32.mxu0 0.0
    %122 = vmatmul.mubr.f32.gmra.mrb[0].mxu0 %v55
    %v123 = vpop.f32.mrb[0].mxu0
    %v124 = vadd.f32 %v51, %v123
    %v125 = vpop.f32.mrb[0].mxu0
    %126 = vdwg.mxu0
    %127 = vmax.xlane.f32.xlu0 %v124
    %v128 = vpop.xlane.xlu0 %127
    %v129 = vsub.f32 %v124, %v128
    %v130 = vmul.f32 %v129, 1.442695
    %v131 = vpow.pop %v130
    %132 = vadd.xlane.f32.xlu0 %v131
    %v133 = vpop.xlane.xlu0 %132
    %v134 = vlog2.pop %v133
    %v135 = vmul.f32 %v134, 0.6931472
    %v136 = vsub.f32 %v129, %v135
    %137 = vst [vmem:[#allocation7] sm:$0xff] %v136
    // Predicated region
    $region22: #{_mlp_forward_impl.1} parent=1 // pred_check
      _
    $region23: #{_mlp_forward_impl.1} parent=1 // pred_check_branch
      %139 = sbr.rel (0) target = $region25
    $region24: #{_mlp_forward_impl.1} parent=1 // pred_region
      %s141 = ssub.s32 128, 128
      %142 = vsyncadd [#allocation4], %s141
      %s144 = sshll.u32 [#allocation7], 4
      %s145 = int_to_ptr.vmem [resolvable:$true] %s144
      %147 = dma.vmem_to_hbm [thread:$0]  %s145, 128, %s3, [#allocation4]
    $region25: #{_mlp_forward_impl.1} parent=1 // pred_fallthru
      _
    // Predicated region
    $region26: #{_mlp_forward_impl.1} parent=1 // pred_check
      _
    $region27: #{_mlp_forward_impl.1} parent=1 // pred_check_branch
      %149 = sbr.rel (0) target = $region29
    $region28: #{_mlp_forward_impl.1} parent=1 // pred_region
      %150 = dma.done [#allocation4], 128
    $region29: #{_mlp_forward_impl.1} parent=1 // pred_fallthru
      _
    %151 = vsyncpa [#allocation3], 1
    %152 = vsyncpa [#allocation6], 1
    %153 = vsyncpa [#allocation4], 1

</llo_original>
